<compile_context>
chip_gen: v7x
topology: tpu7x:2x2x1
jax: 0.10.0
libtpu: 0.0.40
codegen_flags: <defaults>
</compile_context>

<pallas_src>
import jax
import jax.numpy as jnp
from jax import lax
from jax.experimental import pallas as pl
from jax.experimental.pallas import tpu as pltpu


def _round_up(x, m):
    return ((x + m - 1) // m) * m


_SMALL_BB = 16  # below this, latent rows are fetched with single-row reads


# ----------------------------------------------------------------------------
# Fused forward kernel (whole TCN + MLP head in one pallas_call)
# ----------------------------------------------------------------------------
def _make_fused_kernel(BB, T, C, K, L, dils, has_down0, wmeta, bmeta, mm_dtype):
    """BB: batch rows per grid step; T: (truncated) time; C: hidden channels."""
    BT = BB * T

    def kernel(x0_ref, noise_ref, w_ref, b_ref, o_ref, act_ref):
        # Per-row within-sequence time index, built in-kernel (no HBM input).
        t_idx = lax.broadcasted_iota(jnp.int32, (BT, 1), 0)
        if BB > 1:
            t_idx = t_idx % T

        mask_cache = {}

        def mask(s):
            # one compare/cast per distinct shift, shared by conv1/conv2 of a block
            if s not in mask_cache:
                mask_cache[s] = (t_idx >= s).astype(jnp.float32)
            return mask_cache[s]

        def wmat(name):
            off, r, c = wmeta[name]
            return w_ref[off:off + r, :c]          # static slice of the weight slab

        def bias(name):
            r, c = bmeta[name]
            return b_ref[r:r + 1, :c]              # single-row f32 bias

        def mm(a, name):
            return jnp.dot(a.astype(mm_dtype), wmat(name),
                           preferred_element_type=jnp.float32)

        def delayed(v, s):
            """v delayed by s timesteps, causal zero padding per sequence."""
            if s == 0:
                return v
            if s >= T:
                return jnp.zeros_like(v)
            # XLU sublane rotate (no concat/pad VMEM copy); mask kills wrapped /
            # cross-sequence rows.
            return pltpu.roll(v, shift=s, axis=0) * mask(s)

        def causal_conv(v, wname, bname, dil):
            """Single im2col matmul: (BT, K*C) @ (K*C, Cout) + bias."""
            m = jnp.concatenate([delayed(v, j * dil) for j in range(K)], axis=1)
            return mm(m, wname) + bias(bname)

        # ---- layer 0 (Cin = 1): conv1 + 1x1 residual fused in one matmul ----
        x0 = x0_ref[...]                            # (BT, K) pre-shifted taps, f32
        y0 = mm(x0, "wc0")                          # (BT, C) or (BT, 2C)
        h = jnp.maximum(y0[:, :C] + bias("b1_0"), 0.0)
        out = jnp.maximum(causal_conv(h, "w2_0", "b2_0", dils[0]), 0.0)
        if has_down0:
            res = y0[:, C:2 * C] + bias("bd_0")     # folded 1x1 downsample
        else:
            res = x0[:, 0:1]                        # Cin == Cout == 1
        act = jnp.maximum(out + res, 0.0)           # (BT, C)

        # ---- layers 1 .. L-1 (Cin == Cout == C, identity residual) ----------
        for i in range(1, L):
            d = dils[i]
            h = jnp.maximum(causal_conv(act, f"w1_{i}", f"b1_{i}", d), 0.0)
            out = jnp.maximum(causal_conv(h, f"w2_{i}", f"b2_{i}", d), 0.0)
            act = jnp.maximum(out + act, 0.0)

        # ---- latent = activation at the last timestep of each sequence ------
        act_ref[...] = act
        if BB <= _SMALL_BB:
            latent = jnp.concatenate(
                [act_ref[(b + 1) * T - 1:(b + 1) * T, :] for b in range(BB)],
                axis=0)                              # (BB, C)
        else:
            latent = act_ref[pl.ds(T - 1, BB, stride=T), :]   # strided row read

        # ---- MLP head: cat(latent, noise) folded into a split matmul --------
        z = mm(latent, "mlp_w1a") + mm(noise_ref[...], "mlp_w1b") + bias("mlp_b1")
        hm = jnp.maximum(z, 0.0)
        o_ref[...] = mm(hm, "mlp_w2") + bias("mlp_b2")

    return kernel


# ----------------------------------------------------------------------------
# Wrapper-side packing / pre-shift (tiny, one-time XLA ops)
# ----------------------------------------------------------------------------
def _layer0_taps(x, K, dil):
    """x: (B, T, 1) -> (B*T, K) pre-shifted causal taps (tap j = delay j*dil)."""
    B, T, _ = x.shape
    xf = x[..., 0]
    cols = []
    for j in range(K):
        s = j * dil
        if s == 0:
            sh = xf
        elif s >= T:
            sh = jnp.zeros_like(xf)
        else:
            sh = jnp.pad(xf, ((0, 0), (s, 0)))[:, :T]
        cols.append(sh.reshape(B * T, 1))
    return jnp.concatenate(cols, axis=1)


def _pack_params(params, matmul_dtype):
    """Pack all matmul weights into one lane-padded slab, biases into another."""
    K = params["kernel_size"]
    C = params["hidden_size"]
    blocks = params["blocks"]
    L = len(blocks)
    has_down0 = "wd" in blocks[0]
    m = params["mlp"]
    F = m["w1"].shape[1]

    wmats = []
    w1_0 = blocks[0]["w1"].reshape(K, -1)                        # (K, C), Cin == 1
    if has_down0:
        wd_rows = jnp.zeros((K, C), jnp.float32).at[0, :].set(
            blocks[0]["wd"].reshape(C))
        wmats.append(("wc0", jnp.concatenate([w1_0, wd_rows], axis=1)))  # (K, 2C)
    else:
        wmats.append(("wc0", w1_0))
    wmats.append(("w2_0", blocks[0]["w2"].reshape(K * C, C)))
    for i in range(1, L):
        wmats.append((f"w1_{i}", blocks[i]["w1"].reshape(K * C, C)))
        wmats.append((f"w2_{i}", blocks[i]["w2"].reshape(K * C, C)))
    wmats.append(("mlp_w1a", m["w1"][:C, :]))
    wmats.append(("mlp_w1b", m["w1"][C:, :]))
    wmats.append(("mlp_w2", m["w2"]))

    LW = _round_up(max(128, F, max(int(a.shape[1]) for _, a in wmats)), 128)
    ALIGN = 16                              # sublane-safe for both f32 and bf16
    wmeta, off = {}, 0
    for name, a in wmats:
        wmeta[name] = (off, int(a.shape[0]), int(a.shape[1]))
        off += _round_up(int(a.shape[0]), ALIGN)
    wslab = jnp.zeros((_round_up(off, ALIGN), LW), jnp.float32)
    for name, a in wmats:
        o, r, c = wmeta[name]
        wslab = wslab.at[o:o + r, :c].set(a.astype(jnp.float32))
    wslab = wslab.astype(matmul_dtype)

    biases = [("b1_0", blocks[0]["b1"]), ("b2_0", blocks[0]["b2"])]
    if has_down0:
        biases.append(("bd_0", blocks[0]["bd"]))
    for i in range(1, L):
        biases += [(f"b1_{i}", blocks[i]["b1"]), (f"b2_{i}", blocks[i]["b2"])]
    biases += [("mlp_b1", m["b1"]), ("mlp_b2", m["b2"])]
    bmeta = {}
    bslab = jnp.zeros((_round_up(len(biases), 8), LW), jnp.float32)
    for r, (name, b) in enumerate(biases):
        b = jnp.asarray(b, jnp.float32).reshape(-1)
        bmeta[name] = (r, int(b.shape[0]))
        bslab = bslab.at[r, :b.shape[0]].set(b)
    return wslab, wmeta, bslab, bmeta


def _pick_batch_block(B, T, C, K, ns, budget_bytes):
    """Largest batch block whose estimated live VMEM fits the budget."""
    def est(bb):
        bt = bb * T
        # im2col (K*C) + a few live (C)-wide activations in f32, 2x for compiler
        # temporaries, plus double-buffered inputs.
        return 8 * bt * (K * C + 4 * C) + 8 * (bt * K + bb * ns)

    if est(B) <= budget_bytes:
        return B
    cands = [bb for bb in range(8, B, 8) if B % bb == 0]
    for bb in sorted(cands, reverse=True):
        if est(bb) <= budget_bytes:
            return bb
    return cands[0] if cands else B


def generator_forward(params, history_window, noise, *, batch_block=None,
                      matmul_dtype=jnp.bfloat16,
                      vmem_budget_bytes=40 * 1024 * 1024):
    """history_window: (B, T, 1), noise: (B, noise_size) -> (B, 1, 1)."""
    x = history_window.astype(jnp.float32)
    B, T, _ = x.shape
    K = params["kernel_size"]
    C = params["hidden_size"]
    L = len(params["blocks"])
    ns = noise.shape[1]
    dils = [blk["dilation"] for blk in params["blocks"]]
    has_down0 = "wd" in params["blocks"][0]

    # Receptive-field truncation: only the last R timesteps influence the latent.
    R = 1 + sum(2 * (K - 1) * d for d in dils)
    T_eff = min(T, _round_up(R, 8))
    if T_eff < T:
        x = x[:, T - T_eff:, :]
    T = T_eff

    bb = _pick_batch_block(B, T, C, K, ns, vmem_budget_bytes) \
        if batch_block is None else batch_block
    assert B % bb == 0 and (bb == B or bb % 8 == 0)
    nb = B // bb

    x0_taps = _layer0_taps(x, K, dils[0])                      # (B*T, K)
    wslab, wmeta, bslab, bmeta = _pack_params(params, matmul_dtype)
    kernel = _make_fused_kernel(bb, T, C, K, L, dils, has_down0,
                                wmeta, bmeta, matmul_dtype)

    out = pl.pallas_call(
        kernel,
        grid=(nb,),
        out_shape=jax.ShapeDtypeStruct((B, 1), jnp.float32),
        in_specs=[
            pl.BlockSpec((bb * T, K), lambda i: (i, 0)),       # pre-shifted taps
            pl.BlockSpec((bb, ns), lambda i: (i, 0)),          # noise rows
            pl.BlockSpec(wslab.shape, lambda i: (0, 0)),       # grid-invariant weights
            pl.BlockSpec(bslab.shape, lambda i: (0, 0)),       # grid-invariant biases
        ],
        out_specs=pl.BlockSpec((bb, 1), lambda i: (i, 0)),
        scratch_shapes=[pltpu.VMEM((bb * T, C), jnp.float32)], # latent staging
        compiler_params=pltpu.CompilerParams(
            dimension_semantics=("parallel",),
            vmem_limit_bytes=64 * 1024 * 1024),
    )(x0_taps, noise.astype(jnp.float32), wslab, bslab)
    return out[:, :, None]                                     # (B, 1, 1)


# ----------------------------------------------------------------------------
# Parameter init (deterministic, synthetic).  Conv tap convention: w[j]
# multiplies the input delayed by j*dilation timesteps (causal, zero-padded).
# ----------------------------------------------------------------------------
def init_params(key, noise_size, hidden_size, num_layers, kernel_size):
    channel_sizes = [1] + [hidden_size] * num_layers
    blocks = []
    for i in range(num_layers):
        cin, cout = channel_sizes[i], channel_sizes[i + 1]
        key, k1, k2, k3, k4, k5, k6 = jax.random.split(key, 7)
        blk = dict(
            w1=0.1 * jax.random.normal(k1, (kernel_size, cin, cout), jnp.float32),
            b1=0.1 * jax.random.normal(k2, (cout,), jnp.float32),
            w2=0.1 * jax.random.normal(k3, (kernel_size, cout, cout), jnp.float32),
            b2=0.1 * jax.random.normal(k4, (cout,), jnp.float32),
            dilation=2 ** i,
        )
        if cin != cout:  # 1x1 downsample conv on the residual path
            blk["wd"] = 0.1 * jax.random.normal(k5, (cin, cout), jnp.float32)
            blk["bd"] = 0.1 * jax.random.normal(k6, (cout,), jnp.float32)
        blocks.append(blk)

    F = hidden_size + noise_size
    key, k1, k2, k3, k4 = jax.random.split(key, 5)
    mlp = dict(
        w1=0.1 * jax.random.normal(k1, (F, F), jnp.float32),
        b1=0.1 * jax.random.normal(k2, (F,), jnp.float32),
        w2=0.1 * jax.random.normal(k3, (F, 1), jnp.float32),
        b2=0.1 * jax.random.normal(k4, (1,), jnp.float32),
    )
    return dict(blocks=blocks, mlp=mlp,
                kernel_size=kernel_size, hidden_size=hidden_size)


# ----------------------------------------------------------------------------
# Pure-JAX reference (validates the Pallas lowering)
# ----------------------------------------------------------------------------
def _ref_causal_conv(x, w, b, dil):
    B, T, _ = x.shape
    K = w.shape[0]
    acc = jnp.zeros((B, T, w.shape[-1]), jnp.float32) + b
    for j in range(K):
        s = j * dil
        xs = jnp.pad(x, ((0, 0), (s, 0), (0, 0)))[:, :T, :]
        acc = acc + jnp.einsum("btc,cd->btd", xs, w[j])
    return acc


def _ref_block(x, blk, K):
    dil = blk["dilation"]
    h = jnp.maximum(_ref_causal_conv(x, blk["w1"], blk["b1"], dil), 0.0)
    out = jnp.maximum(_ref_causal_conv(h, blk["w2"], blk["b2"], dil), 0.0)
    if "wd" in blk:
        res = jnp.einsum("btc,cd->btd", x, blk["wd"]) + blk["bd"]
    else:
        res = x
    return jnp.maximum(out + res, 0.0)


def reference_forward(params, history_window, noise):
    x = history_window.astype(jnp.float32)
    for blk in params["blocks"]:
        x = _ref_block(x, blk, params["kernel_size"])
    latent = x[:, -1, :]
    z = jnp.concatenate([latent, noise.astype(jnp.float32)], axis=1)
    m = params["mlp"]
    h = jnp.maximum(z @ m["w1"] + m["b1"], 0.0)
    return (h @ m["w2"] + m["b2"])[:, :, None]


# ----------------------------------------------------------------------------
if __name__ == "__main__":
    B = 2
    history_window_size = 16
    noise_size = 4
    hidden_size = 32
    num_layers = 2
    kernel_size = 3

    key = jax.random.PRNGKey(0)
    kp, kh, kn = jax.random.split(key, 3)

    params = init_params(kp, noise_size, hidden_size, num_layers, kernel_size)
    history_window = jax.random.normal(kh, (B, history_window_size, 1), jnp.float32)
    noise = jax.random.normal(kn, (B, noise_size), jnp.float32)

    ref = reference_forward(params, history_window, noise)

    # f32 matmul operands: tight check against the pure-JAX reference.
    out_f32 = jax.block_until_ready(
        generator_forward(params, history_window, noise, matmul_dtype=jnp.float32))
    assert out_f32.shape == (B, 1, 1), out_f32.shape
    err_f32 = float(jnp.max(jnp.abs(out_f32 - ref)))
    assert err_f32 < 2e-4, f"f32 mismatch vs reference: {err_f32}"

    # bf16 matmul operands (production default): dtype-aware tolerance.
    out_bf16 = jax.block_until_ready(
        generator_forward(params, history_window, noise))
    assert out_bf16.shape == (B, 1, 1), out_bf16.shape
    err_bf16 = float(jnp.max(jnp.abs(out_bf16 - ref)))
    assert err_bf16 < 3e-2, f"bf16 mismatch vs reference: {err_bf16}"

    print("KERNEL_OK")
</pallas_src>

<mosaic_0001>
module attributes {stable_mosaic.version = 11 : i64} {
  func.func @kernel(%arg0: i32, %arg1: memref<32x3xf32, #tpu.memory_space<vmem>>, %arg2: memref<2x4xf32, #tpu.memory_space<vmem>>, %arg3: memref<400x128xf32, #tpu.memory_space<vmem>>, %arg4: memref<8x128xf32, #tpu.memory_space<vmem>>, %arg5: memref<2x1xf32, #tpu.memory_space<vmem>>, %arg6: memref<32x32xf32, #tpu.memory_space<vmem>>) attributes {dimension_semantics = [#tpu.dimension_semantics<parallel>], iteration_bounds = array<i64: 1>, scalar_prefetch = 0 : i64, scratch_operands = 1 : i64, tpu.core_type = #tpu.core_type<tc>, window_params = [{transform_indices = @transform_0, window_bounds = array<i64: 32, 3>}, {transform_indices = @transform_1, window_bounds = array<i64: 2, 4>}, {pipeline_mode = #tpu.pipeline_mode<synchronous>, transform_indices = @transform_2, window_bounds = array<i64: 400, 128>}, {pipeline_mode = #tpu.pipeline_mode<synchronous>, transform_indices = @transform_3, window_bounds = array<i64: 8, 128>}, {transform_indices = @transform_4, window_bounds = array<i64: 2, 1>}]} {
    %0 = tpu.iota {dimensions = array<i32: 0>} : vector<32x1xi32>
    %c16_i32 = arith.constant 16 : i32
    %c0_i32 = arith.constant 0 : i32
    %1 = arith.cmpi eq, %c16_i32, %c0_i32 : i32
    %c1_i32 = arith.constant 1 : i32
    %2 = arith.select %1, %c1_i32, %c16_i32 : i32
    %3 = vector.broadcast %2 : i32 to vector<32x1xi32>
    %4 = arith.remsi %0, %3 : vector<32x1xi32>
    %c0_i32_0 = arith.constant 0 : i32
    %5 = vector.broadcast %c0_i32_0 : i32 to vector<32x1xi32>
    %6 = arith.cmpi ne, %4, %5 : vector<32x1xi32>
    %c0_i32_1 = arith.constant 0 : i32
    %7 = vector.broadcast %c0_i32_1 : i32 to vector<32x1xi32>
    %8 = arith.cmpi slt, %4, %7 : vector<32x1xi32>
    %c0_i32_2 = arith.constant 0 : i32
    %9 = arith.cmpi slt, %2, %c0_i32_2 : i32
    %10 = vector.broadcast %9 : i1 to vector<32x1xi1>
    %11 = vector.broadcast %10 : vector<32x1xi1> to vector<32x1xi1>
    %12 = arith.xori %8, %11 : vector<32x1xi1>
    %13 = arith.andi %12, %6 : vector<32x1xi1>
    %14 = vector.broadcast %2 : i32 to vector<32x1xi32>
    %15 = arith.addi %4, %14 : vector<32x1xi32>
    %16 = arith.select %13, %15, %4 : vector<32x1xi1>, vector<32x1xi32>
    %c0 = arith.constant 0 : index
    %c0_3 = arith.constant 0 : index
    %17 = vector.load %arg1[%c0, %c0_3] : memref<32x3xf32, #tpu.memory_space<vmem>>, vector<32x3xf32>
    %c0_4 = arith.constant 0 : index
    %c0_5 = arith.constant 0 : index
    %18 = vector.load %arg3[%c0_4, %c0_5] : memref<400x128xf32, #tpu.memory_space<vmem>>, vector<3x64xf32>
    %cst = arith.constant dense<0.000000e+00> : vector<32x64xf32>
    %19 = tpu.matmul %17, %18, %cst {dimension_numbers = #tpu.dot_dimension_numbers<[1], [0], [0], [1], [0, 0, 1, 1], [], []>} : vector<32x3xf32>, vector<3x64xf32>, vector<32x64xf32> -> vector<32x64xf32>
    %20 = vector.extract_strided_slice %19 {offsets = [0, 0], sizes = [32, 32], strides = [1, 1]} : vector<32x64xf32> to vector<32x32xf32>
    %c0_6 = arith.constant 0 : index
    %c0_7 = arith.constant 0 : index
    %21 = vector.load %arg4[%c0_6, %c0_7] : memref<8x128xf32, #tpu.memory_space<vmem>>, vector<1x32xf32>
    %22 = vector.broadcast %21 : vector<1x32xf32> to vector<32x32xf32>
    %23 = arith.addf %20, %22 : vector<32x32xf32>
    %cst_8 = arith.constant 0.000000e+00 : f32
    %24 = vector.broadcast %cst_8 : f32 to vector<32x32xf32>
    %25 = arith.maximumf %23, %24 : vector<32x32xf32>
    %c1_i32_9 = arith.constant 1 : i32
    %26 = tpu.dynamic_rotate %25 by %c1_i32_9 dim 0 : vector<32x32xf32>, i32 -> vector<32x32xf32>
    %c1_i32_10 = arith.constant 1 : i32
    %27 = vector.broadcast %c1_i32_10 : i32 to vector<32x1xi32>
    %28 = arith.cmpi sge, %16, %27 : vector<32x1xi32>
    %29 = arith.extui %28 : vector<32x1xi1> to vector<32x1xi32>
    %30 = arith.sitofp %29 : vector<32x1xi32> to vector<32x1xf32>
    %31 = vector.broadcast %30 : vector<32x1xf32> to vector<32x32xf32>
    %32 = arith.mulf %26, %31 : vector<32x32xf32>
    %c2_i32 = arith.constant 2 : i32
    %33 = tpu.dynamic_rotate %25 by %c2_i32 dim 0 : vector<32x32xf32>, i32 -> vector<32x32xf32>
    %c2_i32_11 = arith.constant 2 : i32
    %34 = vector.broadcast %c2_i32_11 : i32 to vector<32x1xi32>
    %35 = arith.cmpi sge, %16, %34 : vector<32x1xi32>
    %36 = arith.extui %35 : vector<32x1xi1> to vector<32x1xi32>
    %37 = arith.sitofp %36 : vector<32x1xi32> to vector<32x1xf32>
    %38 = vector.broadcast %37 : vector<32x1xf32> to vector<32x32xf32>
    %39 = arith.mulf %33, %38 : vector<32x32xf32>
    %40 = tpu.concatenate %25, %32, %39 in 1 : vector<32x32xf32>, vector<32x32xf32>, vector<32x32xf32> -> vector<32x96xf32>
    %c16 = arith.constant 16 : index
    %c0_12 = arith.constant 0 : index
    %41 = vector.load %arg3[%c16, %c0_12] : memref<400x128xf32, #tpu.memory_space<vmem>>, vector<96x32xf32>
    %cst_13 = arith.constant dense<0.000000e+00> : vector<32x32xf32>
    %42 = tpu.matmul %40, %41, %cst_13 {dimension_numbers = #tpu.dot_dimension_numbers<[1], [0], [0], [1], [0, 0, 1, 1], [], []>} : vector<32x96xf32>, vector<96x32xf32>, vector<32x32xf32> -> vector<32x32xf32>
    %c1 = arith.constant 1 : index
    %c0_14 = arith.constant 0 : index
    %43 = vector.load %arg4[%c1, %c0_14] : memref<8x128xf32, #tpu.memory_space<vmem>>, vector<1x32xf32>
    %44 = vector.broadcast %43 : vector<1x32xf32> to vector<32x32xf32>
    %45 = arith.addf %42, %44 : vector<32x32xf32>
    %cst_15 = arith.constant 0.000000e+00 : f32
    %46 = vector.broadcast %cst_15 : f32 to vector<32x32xf32>
    %47 = arith.maximumf %45, %46 : vector<32x32xf32>
    %48 = vector.extract_strided_slice %19 {offsets = [0, 32], sizes = [32, 32], strides = [1, 1]} : vector<32x64xf32> to vector<32x32xf32>
    %c2 = arith.constant 2 : index
    %c0_16 = arith.constant 0 : index
    %49 = vector.load %arg4[%c2, %c0_16] : memref<8x128xf32, #tpu.memory_space<vmem>>, vector<1x32xf32>
    %50 = vector.broadcast %49 : vector<1x32xf32> to vector<32x32xf32>
    %51 = arith.addf %48, %50 : vector<32x32xf32>
    %52 = arith.addf %47, %51 : vector<32x32xf32>
    %cst_17 = arith.constant 0.000000e+00 : f32
    %53 = vector.broadcast %cst_17 : f32 to vector<32x32xf32>
    %54 = arith.maximumf %52, %53 : vector<32x32xf32>
    %c2_i32_18 = arith.constant 2 : i32
    %55 = tpu.dynamic_rotate %54 by %c2_i32_18 dim 0 : vector<32x32xf32>, i32 -> vector<32x32xf32>
    %56 = vector.broadcast %37 : vector<32x1xf32> to vector<32x32xf32>
    %57 = arith.mulf %55, %56 : vector<32x32xf32>
    %c4_i32 = arith.constant 4 : i32
    %58 = tpu.dynamic_rotate %54 by %c4_i32 dim 0 : vector<32x32xf32>, i32 -> vector<32x32xf32>
    %c4_i32_19 = arith.constant 4 : i32
    %59 = vector.broadcast %c4_i32_19 : i32 to vector<32x1xi32>
    %60 = arith.cmpi sge, %16, %59 : vector<32x1xi32>
    %61 = arith.extui %60 : vector<32x1xi1> to vector<32x1xi32>
    %62 = arith.sitofp %61 : vector<32x1xi32> to vector<32x1xf32>
    %63 = vector.broadcast %62 : vector<32x1xf32> to vector<32x32xf32>
    %64 = arith.mulf %58, %63 : vector<32x32xf32>
    %65 = tpu.concatenate %54, %57, %64 in 1 : vector<32x32xf32>, vector<32x32xf32>, vector<32x32xf32> -> vector<32x96xf32>
    %c112 = arith.constant 112 : index
    %c0_20 = arith.constant 0 : index
    %66 = vector.load %arg3[%c112, %c0_20] : memref<400x128xf32, #tpu.memory_space<vmem>>, vector<96x32xf32>
    %cst_21 = arith.constant dense<0.000000e+00> : vector<32x32xf32>
    %67 = tpu.matmul %65, %66, %cst_21 {dimension_numbers = #tpu.dot_dimension_numbers<[1], [0], [0], [1], [0, 0, 1, 1], [], []>} : vector<32x96xf32>, vector<96x32xf32>, vector<32x32xf32> -> vector<32x32xf32>
    %c3 = arith.constant 3 : index
    %c0_22 = arith.constant 0 : index
    %68 = vector.load %arg4[%c3, %c0_22] : memref<8x128xf32, #tpu.memory_space<vmem>>, vector<1x32xf32>
    %69 = vector.broadcast %68 : vector<1x32xf32> to vector<32x32xf32>
    %70 = arith.addf %67, %69 : vector<32x32xf32>
    %cst_23 = arith.constant 0.000000e+00 : f32
    %71 = vector.broadcast %cst_23 : f32 to vector<32x32xf32>
    %72 = arith.maximumf %70, %71 : vector<32x32xf32>
    %c2_i32_24 = arith.constant 2 : i32
    %73 = tpu.dynamic_rotate %72 by %c2_i32_24 dim 0 : vector<32x32xf32>, i32 -> vector<32x32xf32>
    %74 = vector.broadcast %37 : vector<32x1xf32> to vector<32x32xf32>
    %75 = arith.mulf %73, %74 : vector<32x32xf32>
    %c4_i32_25 = arith.constant 4 : i32
    %76 = tpu.dynamic_rotate %72 by %c4_i32_25 dim 0 : vector<32x32xf32>, i32 -> vector<32x32xf32>
    %77 = vector.broadcast %62 : vector<32x1xf32> to vector<32x32xf32>
    %78 = arith.mulf %76, %77 : vector<32x32xf32>
    %79 = tpu.concatenate %72, %75, %78 in 1 : vector<32x32xf32>, vector<32x32xf32>, vector<32x32xf32> -> vector<32x96xf32>
    %c208 = arith.constant 208 : index
    %c0_26 = arith.constant 0 : index
    %80 = vector.load %arg3[%c208, %c0_26] : memref<400x128xf32, #tpu.memory_space<vmem>>, vector<96x32xf32>
    %cst_27 = arith.constant dense<0.000000e+00> : vector<32x32xf32>
    %81 = tpu.matmul %79, %80, %cst_27 {dimension_numbers = #tpu.dot_dimension_numbers<[1], [0], [0], [1], [0, 0, 1, 1], [], []>} : vector<32x96xf32>, vector<96x32xf32>, vector<32x32xf32> -> vector<32x32xf32>
    %c4 = arith.constant 4 : index
    %c0_28 = arith.constant 0 : index
    %82 = vector.load %arg4[%c4, %c0_28] : memref<8x128xf32, #tpu.memory_space<vmem>>, vector<1x32xf32>
    %83 = vector.broadcast %82 : vector<1x32xf32> to vector<32x32xf32>
    %84 = arith.addf %81, %83 : vector<32x32xf32>
    %cst_29 = arith.constant 0.000000e+00 : f32
    %85 = vector.broadcast %cst_29 : f32 to vector<32x32xf32>
    %86 = arith.maximumf %84, %85 : vector<32x32xf32>
    %87 = arith.addf %86, %54 : vector<32x32xf32>
    %cst_30 = arith.constant 0.000000e+00 : f32
    %88 = vector.broadcast %cst_30 : f32 to vector<32x32xf32>
    %89 = arith.maximumf %87, %88 : vector<32x32xf32>
    %c0_31 = arith.constant 0 : index
    %c0_32 = arith.constant 0 : index
    %90 = vector.load %arg6[%c0_31, %c0_32] : memref<32x32xf32, #tpu.memory_space<vmem>>, vector<32x32xf32>
    tpu.vector_store %arg6[%c0_31, %c0_32], %89 {strides = array<i32>} : memref<32x32xf32, #tpu.memory_space<vmem>>, vector<32x32xf32>,
    %c15 = arith.constant 15 : index
    %c0_33 = arith.constant 0 : index
    %91 = vector.load %arg6[%c15, %c0_33] : memref<32x32xf32, #tpu.memory_space<vmem>>, vector<1x32xf32>
    %c31 = arith.constant 31 : index
    %c0_34 = arith.constant 0 : index
    %92 = vector.load %arg6[%c31, %c0_34] : memref<32x32xf32, #tpu.memory_space<vmem>>, vector<1x32xf32>
    %93 = tpu.concatenate %91, %92 in 0 : vector<1x32xf32>, vector<1x32xf32> -> vector<2x32xf32>
    %c304 = arith.constant 304 : index
    %c0_35 = arith.constant 0 : index
    %94 = vector.load %arg3[%c304, %c0_35] : memref<400x128xf32, #tpu.memory_space<vmem>>, vector<32x36xf32>
    %cst_36 = arith.constant dense<0.000000e+00> : vector<2x36xf32>
    %95 = tpu.matmul %93, %94, %cst_36 {dimension_numbers = #tpu.dot_dimension_numbers<[1], [0], [0], [1], [0, 0, 1, 1], [], []>} : vector<2x32xf32>, vector<32x36xf32>, vector<2x36xf32> -> vector<2x36xf32>
    %c0_37 = arith.constant 0 : index
    %c0_38 = arith.constant 0 : index
    %96 = vector.load %arg2[%c0_37, %c0_38] : memref<2x4xf32, #tpu.memory_space<vmem>>, vector<2x4xf32>
    %c336 = arith.constant 336 : index
    %c0_39 = arith.constant 0 : index
    %97 = vector.load %arg3[%c336, %c0_39] : memref<400x128xf32, #tpu.memory_space<vmem>>, vector<4x36xf32>
    %cst_40 = arith.constant dense<0.000000e+00> : vector<2x36xf32>
    %98 = tpu.matmul %96, %97, %cst_40 {dimension_numbers = #tpu.dot_dimension_numbers<[1], [0], [0], [1], [0, 0, 1, 1], [], []>} : vector<2x4xf32>, vector<4x36xf32>, vector<2x36xf32> -> vector<2x36xf32>
    %99 = arith.addf %95, %98 : vector<2x36xf32>
    %c5 = arith.constant 5 : index
    %c0_41 = arith.constant 0 : index
    %100 = vector.load %arg4[%c5, %c0_41] : memref<8x128xf32, #tpu.memory_space<vmem>>, vector<1x36xf32>
    %101 = vector.broadcast %100 : vector<1x36xf32> to vector<2x36xf32>
    %102 = arith.addf %99, %101 : vector<2x36xf32>
    %cst_42 = arith.constant 0.000000e+00 : f32
    %103 = vector.broadcast %cst_42 : f32 to vector<2x36xf32>
    %104 = arith.maximumf %102, %103 : vector<2x36xf32>
    %c352 = arith.constant 352 : index
    %c0_43 = arith.constant 0 : index
    %105 = vector.load %arg3[%c352, %c0_43] : memref<400x128xf32, #tpu.memory_space<vmem>>, vector<36x1xf32>
    %cst_44 = arith.constant dense<0.000000e+00> : vector<2x1xf32>
    %106 = tpu.matmul %104, %105, %cst_44 {dimension_numbers = #tpu.dot_dimension_numbers<[1], [0], [0], [1], [0, 0, 1, 1], [], []>} : vector<2x36xf32>, vector<36x1xf32>, vector<2x1xf32> -> vector<2x1xf32>
    %c6 = arith.constant 6 : index
    %c0_45 = arith.constant 0 : index
    %107 = vector.load %arg4[%c6, %c0_45] : memref<8x128xf32, #tpu.memory_space<vmem>>, vector<1x1xf32>
    %108 = vector.broadcast %107 : vector<1x1xf32> to vector<2x1xf32>
    %109 = arith.addf %106, %108 : vector<2x1xf32>
    %c0_46 = arith.constant 0 : index
    %c0_47 = arith.constant 0 : index
    %110 = vector.load %arg5[%c0_46, %c0_47] : memref<2x1xf32, #tpu.memory_space<vmem>>, vector<2x1xf32>
    tpu.vector_store %arg5[%c0_46, %c0_47], %109 {strides = array<i32>} : memref<2x1xf32, #tpu.memory_space<vmem>>, vector<2x1xf32>,
    return
  }
  func.func @transform_0(%arg0: i32) -> (i32, i32) {
    %c0_i32 = arith.constant 0 : i32
    %c0_i32_0 = arith.constant 0 : i32
    return %arg0, %c0_i32 : i32, i32
  }
  func.func @transform_1(%arg0: i32) -> (i32, i32) {
    %c0_i32 = arith.constant 0 : i32
    %c0_i32_0 = arith.constant 0 : i32
    return %arg0, %c0_i32 : i32, i32
  }
  func.func @transform_2(%arg0: i32) -> (i32, i32) {
    %c0_i32 = arith.constant 0 : i32
    %c0_i32_0 = arith.constant 0 : i32
    %c0_i32_1 = arith.constant 0 : i32
    return %c0_i32, %c0_i32_0 : i32, i32
  }
  func.func @transform_3(%arg0: i32) -> (i32, i32) {
    %c0_i32 = arith.constant 0 : i32
    %c0_i32_0 = arith.constant 0 : i32
    %c0_i32_1 = arith.constant 0 : i32
    return %c0_i32, %c0_i32_0 : i32, i32
  }
  func.func @transform_4(%arg0: i32) -> (i32, i32) {
    %c0_i32 = arith.constant 0 : i32
    %c0_i32_0 = arith.constant 0 : i32
    return %arg0, %c0_i32 : i32, i32
  }
}

</mosaic_0001>

<llo_original>
// kernel: tpu_custom_call.1
$region0: #{tpu_custom_call.1}
  #allocation0 [shape = 'u32[]', space=smem, size = 0x4, offset = 0x4, fixed_abs, tag = 'smem constant byte address 0x4 - core index']
  #allocation1 [shape = 'u32[144,128]{1,0:T(1,128)}', space=vmem, size = 0x12000, scoped, tag = 'internal scratch']
  #allocation2 [shape = 'f32[32,32]{1,0:T(8,128)}', space=vmem, size = 0x4000, scoped, tag = 'scratch operand']
  %s0 = inlined_call_operand.hbm [shape: f32[32,3], index: 0, kind: input, shape index: {}]
  %s1 = inlined_call_operand.hbm [shape: f32[2,4], index: 1, kind: input, shape index: {}]
  %s2 = inlined_call_operand.hbm [shape: f32[400,128], index: 2, kind: input, shape index: {}]
  %s3 = inlined_call_operand.hbm [shape: f32[8,128], index: 3, kind: input, shape index: {}]
  %s4 = inlined_call_operand.hbm [shape: f32[2,1], index: 4, kind: output, shape index: {}]
  %s5 = sld [smem:[#allocation0]]
  $region42: #{tpu_custom_call.1} parent=0
    _
  %s7 = ssub.s32 1, %s5
  %s8 = scalar_select 0, %s7, %s5
  $region1: #{tpu_custom_call.1} parent=0
    #allocation3 [shape = 'u8[16384]{0}', space=vmem, size = 0x4000, scoped, tag = 'input window, operand 0, single buffered']
    #allocation4 [shape = 's32[1]{0}', space=sflag, size = 0x4, scoped, tag = 'scoped memory for tpu_custom_call.1']
    #allocation5 [shape = 's32[1]{0}', space=sflag, size = 0x4, scoped, tag = 'scoped memory for tpu_custom_call.1']
    #allocation6 [shape = 'u8[1024]{0}', space=vmem, size = 0x400, scoped, tag = 'input window, operand 1, single buffered']
    #allocation7 [shape = 's32[1]{0}', space=sflag, size = 0x4, scoped, tag = 'scoped memory for tpu_custom_call.1']
    #allocation8 [shape = 'u8[204800]{0}', space=vmem, size = 0x32000, scoped, tag = 'input window, operand 2, single buffered']
    #allocation9 [shape = 'u8[4096]{0}', space=vmem, size = 0x1000, scoped, tag = 'input window, operand 3, single buffered']
    #allocation10 [shape = 's32[1]{0}', space=sflag, size = 0x4, scoped, tag = 'scoped memory for tpu_custom_call.1']
    #allocation11 [shape = 'u8[1024]{0}', space=vmem, size = 0x400, scoped, tag = 'output window, operand 0, single buffered']
    %9 = vsyncpa [#allocation4], 0
    %10 = vsyncpa [#allocation7], 0
    %11 = vsyncpa [#allocation10], 0
    %12 = vsyncpa [#allocation5], 0
    // Predicated region
    $region2: #{tpu_custom_call.1} parent=1 // pred_check
      _
    $region3: #{tpu_custom_call.1} parent=1 // pred_check_branch
      %14 = sbr.rel (0) target = $region5
    $region4: #{tpu_custom_call.1} parent=1 // pred_region
      %s16 = ssub.s32 512, 512
      %17 = vsyncadd [#allocation4], %s16
      %s18 = sshll.u32 [#allocation3], 4
      %s19 = int_to_ptr.vmem [resolvable:$true] %s18
      %24 = dma.hbm_to_vmem [thread:$0]  %s0, 512, %s19, [#allocation4], 128, 128, 8
    $region5: #{tpu_custom_call.1} parent=1 // pred_fallthru
      _
    // Predicated region
    $region6: #{tpu_custom_call.1} parent=1 // pred_check
      _
    $region7: #{tpu_custom_call.1} parent=1 // pred_check_branch
      %26 = sbr.rel (0) target = $region9
    $region8: #{tpu_custom_call.1} parent=1 // pred_region
      %s28 = ssub.s32 32, 32
      %29 = vsyncadd [#allocation7], %s28
      %s31 = sshll.u32 [#allocation6], 4
      %s32 = int_to_ptr.vmem [resolvable:$true] %s31
      %34 = dma.hbm_to_vmem [thread:$0]  %s1, 32, %s32, [#allocation7]
    $region9: #{tpu_custom_call.1} parent=1 // pred_fallthru
      _
    // Predicated region
    $region10: #{tpu_custom_call.1} parent=1 // pred_check
      _
    $region11: #{tpu_custom_call.1} parent=1 // pred_check_branch
      %36 = sbr.rel (0) target = $region13
    $region12: #{tpu_custom_call.1} parent=1 // pred_region
      %s38 = ssub.s32 6400, 6400
      %39 = vsyncadd [#allocation7], %s38
      %s40 = sshll.u32 [#allocation8], 4
      %s41 = int_to_ptr.vmem [resolvable:$true] %s40
      %46 = dma.hbm_to_vmem [thread:$0]  %s2, 6400, %s41, [#allocation7], 128, 128, 8
    $region13: #{tpu_custom_call.1} parent=1 // pred_fallthru
      _
    // Predicated region
    $region14: #{tpu_custom_call.1} parent=1 // pred_check
      _
    $region15: #{tpu_custom_call.1} parent=1 // pred_check_branch
      %48 = sbr.rel (0) target = $region17
    $region16: #{tpu_custom_call.1} parent=1 // pred_region
      %s50 = ssub.s32 128, 128
      %51 = vsyncadd [#allocation10], %s50
      %s53 = sshll.u32 [#allocation9], 4
      %s54 = int_to_ptr.vmem [resolvable:$true] %s53
      %56 = dma.hbm_to_vmem [thread:$0]  %s3, 128, %s54, [#allocation10]
    $region17: #{tpu_custom_call.1} parent=1 // pred_fallthru
      _
    // Predicated region
    $region18: #{tpu_custom_call.1} parent=1 // pred_check
      _
    $region19: #{tpu_custom_call.1} parent=1 // pred_check_branch
      %58 = sbr.rel (0) target = $region21
    $region20: #{tpu_custom_call.1} parent=1 // pred_region
      %59 = dma.done [#allocation4], 512
    $region21: #{tpu_custom_call.1} parent=1 // pred_fallthru
      _
    // Predicated region
    $region22: #{tpu_custom_call.1} parent=1 // pred_check
      _
    $region23: #{tpu_custom_call.1} parent=1 // pred_check_branch
      %61 = sbr.rel (0) target = $region25
    $region24: #{tpu_custom_call.1} parent=1 // pred_region
      %62 = dma.done [#allocation7], 32
    $region25: #{tpu_custom_call.1} parent=1 // pred_fallthru
      _
    // Predicated region
    $region26: #{tpu_custom_call.1} parent=1 // pred_check
      _
    $region27: #{tpu_custom_call.1} parent=1 // pred_check_branch
      %64 = sbr.rel (0) target = $region29
    $region28: #{tpu_custom_call.1} parent=1 // pred_region
      %65 = dma.done [#allocation7], 6400
    $region29: #{tpu_custom_call.1} parent=1 // pred_fallthru
      _
    // Predicated region
    $region30: #{tpu_custom_call.1} parent=1 // pred_check
      _
    $region31: #{tpu_custom_call.1} parent=1 // pred_check_branch
      %67 = sbr.rel (0) target = $region33
    $region32: #{tpu_custom_call.1} parent=1 // pred_region
      %68 = dma.done [#allocation10], 128
    $region33: #{tpu_custom_call.1} parent=1 // pred_fallthru
      _
    %v69 = vlaneseq
    %v70 = vshrl.u32 %v69, 7
    %v71 = vadd.s32 %v70, 8
    %v72 = vadd.s32 %v70, 16
    %v73 = vadd.s32 %v70, 24
    %vm74 = vcmp.lt.s32.totalorder %v70, 0
    %v75 = vsub.s32 0, %v70
    %v76 = vsel %vm74, %v75, %v70
    %v77 = vshrl.u32 %v76, 4
    %v78 = vand.u32 %v76, 15
    %v79 = vsub.s32 0, %v78
    %v80 = vsel %vm74, %v79, %v78
    %vm81 = vcmp.lt.s32.totalorder %v71, 0
    %v82 = vsub.s32 0, %v71
    %v83 = vsel %vm81, %v82, %v71
    %v84 = vshrl.u32 %v83, 4
    %v85 = vand.u32 %v83, 15
    %v86 = vsub.s32 0, %v85
    %v87 = vsel %vm81, %v86, %v85
    %vm88 = vcmp.lt.s32.totalorder %v72, 0
    %v89 = vsub.s32 0, %v72
    %v90 = vsel %vm88, %v89, %v72
    %v91 = vshrl.u32 %v90, 4
    %v92 = vand.u32 %v90, 15
    %v93 = vsub.s32 0, %v92
    %v94 = vsel %vm88, %v93, %v92
    %vm95 = vcmp.lt.s32.totalorder %v73, 0
    %v96 = vsub.s32 0, %v73
    %v97 = vsel %vm95, %v96, %v73
    %v98 = vshrl.u32 %v97, 4
    %v99 = vand.u32 %v97, 15
    %v100 = vsub.s32 0, %v99
    %v101 = vsel %vm95, %v100, %v99
    %vm102 = vcmp.ne.s32.totalorder %v80, 0
    %vm103 = vcmp.ne.s32.totalorder %v87, 0
    %vm104 = vcmp.ne.s32.totalorder %v94, 0
    %vm105 = vcmp.ne.s32.totalorder %v101, 0
    %vm106 = vcmp.lt.s32.totalorder %v80, 0
    %vm107 = vcmp.lt.s32.totalorder %v87, 0
    %vm108 = vcmp.lt.s32.totalorder %v94, 0
    %vm109 = vcmp.lt.s32.totalorder %v101, 0
    %vm110 = vmand %vm106, %vm102
    %vm111 = vmand %vm107, %vm103
    %vm112 = vmand %vm108, %vm104
    %vm113 = vmand %vm109, %vm105
    %v114 = vadd.s32 %v80, 16
    %v115 = vadd.s32 %v87, 16
    %v116 = vadd.s32 %v94, 16
    %v117 = vadd.s32 %v101, 16
    %v118 = vsel %vm110, %v114, %v80
    %v119 = vsel %vm111, %v115, %v87
    %v120 = vsel %vm112, %v116, %v94
    %v121 = vsel %vm113, %v117, %v101
    %v122 = vld [vmem:[#allocation3] sm:$0xff]
    %v123 = vld [vmem:[#allocation3 + $0x8] sm:$0xff]
    %v124 = vld [vmem:[#allocation3 + $0x10] sm:$0xff]
    %v125 = vld [vmem:[#allocation3 + $0x18] sm:$0xff]
    %v126 = vld [vmem:[#allocation8] sm:$0x7]
    %vm127 = vcmask 23552
    %v129 = vsel %vm127, %v122, 0
    %v132 = vsel %vm127, %v123, 0
    %v135 = vsel %vm127, %v124, 0
    %v138 = vsel %vm127, %v125, 0
    %vm140 = vcmask 1042432
    %v142 = vsel %vm140, %v126, 0
    %144 = vmatprep.subr.mxu0 0.0
    %145 = vmatpush1.msra.mxu0 %v142
    %146 = vmatprep.subr.mxu0 0.0
    %147 = vmatpush1.msra.mxu0 0.0
    %148 = vmatprep.subr.mxu0 0.0
    %149 = vmatpush1.msra.mxu0 0.0
    %150 = vmatprep.subr.mxu0 0.0
    %151 = vmatpush1.msra.mxu0 0.0
    %152 = vmatprep.subr.mxu0 0.0
    %153 = vmatpush1.msra.mxu0 0.0
    %154 = vmatprep.subr.mxu0 0.0
    %155 = vmatpush1.msra.mxu0 0.0
    %156 = vmatprep.subr.mxu0 0.0
    %157 = vmatpush1.msra.mxu0 0.0
    %158 = vmatprep.subr.mxu0 0.0
    %159 = vmatpush1.msra.mxu0 0.0
    %160 = vmatprep.subr.mxu0 0.0
    %161 = vmatpush1.msra.mxu0 0.0
    %162 = vmatprep.subr.mxu0 0.0
    %163 = vmatpush1.msra.mxu0 0.0
    %164 = vmatprep.subr.mxu0 0.0
    %165 = vmatpush1.msra.mxu0 0.0
    %166 = vmatprep.subr.mxu0 0.0
    %167 = vmatpush1.msra.mxu0 0.0
    %168 = vmatprep.subr.mxu0 0.0
    %169 = vmatpush1.msra.mxu0 0.0
    %170 = vmatprep.subr.mxu0 0.0
    %171 = vmatpush1.msra.mxu0 0.0
    %172 = vmatprep.subr.mxu0 0.0
    %173 = vmatpush1.msra.mxu0 0.0
    %174 = vmatprep.subr.mxu0 0.0
    %175 = vmatpush1.msra.mxu0 0.0
    %176 = vmatprep.subr.mxu0 0.0
    %177 = vmatpush1.msra.mxu0 0.0
    %178 = vmatprep.subr.mxu0 0.0
    %179 = vmatpush1.msra.mxu0 0.0
    %180 = vmatprep.subr.mxu0 0.0
    %181 = vmatpush1.msra.mxu0 0.0
    %182 = vmatprep.subr.mxu0 0.0
    %183 = vmatpush1.msra.mxu0 0.0
    %184 = vmatprep.subr.mxu0 0.0
    %185 = vmatpush1.msra.mxu0 0.0
    %186 = vmatprep.subr.mxu0 0.0
    %187 = vmatpush1.msra.mxu0 0.0
    %188 = vmatprep.subr.mxu0 0.0
    %189 = vmatpush1.msra.mxu0 0.0
    %190 = vmatprep.subr.mxu0 0.0
    %191 = vmatpush1.msra.mxu0 0.0
    %192 = vmatprep.subr.mxu0 0.0
    %193 = vmatpush1.msra.mxu0 0.0
    %194 = vmatprep.subr.mxu0 0.0
    %195 = vmatpush1.msra.mxu0 0.0
    %196 = vmatprep.subr.mxu0 0.0
    %197 = vmatpush1.msra.mxu0 0.0
    %198 = vmatprep.subr.mxu0 0.0
    %199 = vmatpush1.msra.mxu0 0.0
    %200 = vmatprep.subr.mxu0 0.0
    %201 = vmatpush1.msra.mxu0 0.0
    %202 = vmatprep.subr.mxu0 0.0
    %203 = vmatpush1.msra.mxu0 0.0
    %204 = vmatprep.subr.mxu0 0.0
    %205 = vmatpush1.msra.mxu0 0.0
    %206 = vmatprep.subr.mxu0 0.0
    %207 = vmatpush1.msra.mxu0 0.0
    %208 = vmatprep.mubr.f32.mxu0 0.0
    %209 = vmatmul.mubr.f32.gmra.mrb[0].mxu0 %v129
    %v210 = vpop.f32.mrb[0].mxu0
    %v211 = vadd.f32 0.0, %v210
    %v212 = vpop.f32.mrb[0].mxu0
    %213 = vmatprep.mubr.f32.mxu0 0.0
    %214 = vmatmul.mubr.f32.gmra.mrb[0].mxu0 %v132
    %v215 = vpop.f32.mrb[0].mxu0
    %v216 = vadd.f32 0.0, %v215
    %v217 = vpop.f32.mrb[0].mxu0
    %218 = vmatprep.mubr.f32.mxu0 0.0
    %219 = vmatmul.mubr.f32.gmra.mrb[0].mxu0 %v135
    %v220 = vpop.f32.mrb[0].mxu0
    %v221 = vadd.f32 0.0, %v220
    %v222 = vpop.f32.mrb[0].mxu0
    %223 = vmatprep.mubr.f32.mxu0 0.0
    %224 = vmatmul.mubr.f32.gmra.mrb[0].mxu0 %v138
    %v225 = vpop.f32.mrb[0].mxu0
    %v226 = vadd.f32 0.0, %v225
    %v227 = vpop.f32.mrb[0].mxu0
    %228 = vdwg.mxu0
    %v229 = vld [vmem:[#allocation9] sm:$0x1]
    %v230 = vlaneseq
    %v231 = vshrl.u32 %v230, 7
    %v232 = vsub.s32 0, %v231
    %v233 = vrot.slane %v229, %v232
    %v234 = vadd.f32 %v211, %v233
    %v235 = vadd.f32 %v216, %v233
    %v236 = vadd.f32 %v221, %v233
    %v237 = vadd.f32 %v226, %v233
    %v238 = vmax.f32 %v234, 0.0
    %v239 = vmax.f32 %v235, 0.0
    %v240 = vmax.f32 %v236, 0.0
    %v241 = vmax.f32 %v237, 0.0
    %v242 = vrot.slane %v238, 7
    %v243 = vrot.slane %v239, 7
    %v244 = vrot.slane %v240, 7
    %v245 = vrot.slane %v241, 7
    %vm246 = vcmp.lt.s32.totalorder %v70, 1
    %v247 = vsel %vm246, %v244, %v245
    %v248 = vsel %vm246, %v243, %v244
    %v249 = vsel %vm246, %v242, %v243
    %v250 = vsel %vm246, %v245, %v242
    %vm251 = vcmp.ge.s32.totalorder %v118, 1
    %vm252 = vcmp.ge.s32.totalorder %v119, 1
    %vm253 = vcmp.ge.s32.totalorder %v120, 1
    %vm254 = vcmp.ge.s32.totalorder %v121, 1
    %v255 = vsel %vm251, 1, 0
    %v256 = vsel %vm252, 1, 0
    %v257 = vsel %vm253, 1, 0
    %v258 = vsel %vm254, 1, 0
    %v259 = vcvt.s32.f32 %v255
    %v260 = vcvt.s32.f32 %v256
    %v261 = vcvt.s32.f32 %v257
    %v262 = vcvt.s32.f32 %v258
    %v263 = vmul.f32 %v250, %v259
    %v264 = vmul.f32 %v249, %v260
    %v265 = vmul.f32 %v248, %v261
    %v266 = vmul.f32 %v247, %v262
    %v267 = vrot.slane %v238, 6
    %v268 = vrot.slane %v239, 6
    %v269 = vrot.slane %v240, 6
    %v270 = vrot.slane %v241, 6
    %vm271 = vcmp.lt.s32.totalorder %v70, 2
    %v272 = vsel %vm271, %v269, %v270
    %v273 = vsel %vm271, %v268, %v269
    %v274 = vsel %vm271, %v267, %v268
    %v275 = vsel %vm271, %v270, %v267
    %vm276 = vcmp.ge.s32.totalorder %v118, 2
    %vm277 = vcmp.ge.s32.totalorder %v119, 2
    %vm278 = vcmp.ge.s32.totalorder %v120, 2
    %vm279 = vcmp.ge.s32.totalorder %v121, 2
    %v280 = vsel %vm276, 1, 0
    %v281 = vsel %vm277, 1, 0
    %v282 = vsel %vm278, 1, 0
    %v283 = vsel %vm279, 1, 0
    %v284 = vcvt.s32.f32 %v280
    %v285 = vcvt.s32.f32 %v281
    %v286 = vcvt.s32.f32 %v282
    %v287 = vcvt.s32.f32 %v283
    %v288 = vmul.f32 %v275, %v284
    %v289 = vmul.f32 %v274, %v285
    %v290 = vmul.f32 %v273, %v286
    %v291 = vmul.f32 %v272, %v287
    %296 = vrot.lane.b32.xlu0 %v263, 32
    %v297 = vpop.permute.xlu0 %296
    %298 = vrot.lane.b32.xlu0 %v264, 32
    %v299 = vpop.permute.xlu0 %298
    %300 = vrot.lane.b32.xlu0 %v265, 32
    %v301 = vpop.permute.xlu0 %300
    %302 = vrot.lane.b32.xlu0 %v266, 32
    %v303 = vpop.permute.xlu0 %302
    %312 = vrot.lane.b32.xlu0 %v288, 64
    %v313 = vpop.permute.xlu0 %312
    %314 = vrot.lane.b32.xlu0 %v289, 64
    %v315 = vpop.permute.xlu0 %314
    %316 = vrot.lane.b32.xlu0 %v290, 64
    %v317 = vpop.permute.xlu0 %316
    %318 = vrot.lane.b32.xlu0 %v291, 64
    %v319 = vpop.permute.xlu0 %318
    %vm324 = vcmask 261120
    %v325 = vsel %vm324, %v238, %v297
    %v326 = vsel %vm324, %v239, %v299
    %v327 = vsel %vm324, %v240, %v301
    %v328 = vsel %vm324, %v241, %v303
    %vm329 = vcmask 523264
    %v330 = vsel %vm329, %v325, %v313
    %v331 = vsel %vm329, %v326, %v315
    %v332 = vsel %vm329, %v327, %v317
    %v333 = vsel %vm329, %v328, %v319
    %v334 = vld [vmem:[#allocation8 + $0x10] sm:$0xff]
    %v335 = vld [vmem:[#allocation8 + $0x18] sm:$0xff]
    %v336 = vld [vmem:[#allocation8 + $0x20] sm:$0xff]
    %v337 = vld [vmem:[#allocation8 + $0x28] sm:$0xff]
    %v338 = vld [vmem:[#allocation8 + $0x30] sm:$0xff]
    %v339 = vld [vmem:[#allocation8 + $0x38] sm:$0xff]
    %v340 = vld [vmem:[#allocation8 + $0x40] sm:$0xff]
    %v341 = vld [vmem:[#allocation8 + $0x48] sm:$0xff]
    %v342 = vld [vmem:[#allocation8 + $0x50] sm:$0xff]
    %v343 = vld [vmem:[#allocation8 + $0x58] sm:$0xff]
    %v344 = vld [vmem:[#allocation8 + $0x60] sm:$0xff]
    %v345 = vld [vmem:[#allocation8 + $0x68] sm:$0xff]
    %v346 = vld [vmem:[#allocation9 + $0x1] sm:$0x1]
    %v347 = vlaneseq
    %v348 = vshrl.u32 %v347, 7
    %v349 = vsub.s32 0, %v348
    %v350 = vrot.slane %v346, %v349
    %vm351 = vcmask 785408
    %v353 = vsel %vm351, %v330, 0
    %v356 = vsel %vm351, %v331, 0
    %v359 = vsel %vm351, %v332, 0
    %v362 = vsel %vm351, %v333, 0
    %364 = vmatprep.subr.mxu0 0.0
    %365 = vmatpush1.msra.mxu0 %v334
    %366 = vmatprep.subr.mxu0 0.0
    %367 = vmatpush1.msra.mxu0 %v335
    %368 = vmatprep.subr.mxu0 0.0
    %369 = vmatpush1.msra.mxu0 %v336
    %370 = vmatprep.subr.mxu0 0.0
    %371 = vmatpush1.msra.mxu0 %v337
    %372 = vmatprep.subr.mxu0 0.0
    %373 = vmatpush1.msra.mxu0 %v338
    %374 = vmatprep.subr.mxu0 0.0
    %375 = vmatpush1.msra.mxu0 %v339
    %376 = vmatprep.subr.mxu0 0.0
    %377 = vmatpush1.msra.mxu0 %v340
    %378 = vmatprep.subr.mxu0 0.0
    %379 = vmatpush1.msra.mxu0 %v341
    %380 = vmatprep.subr.mxu0 0.0
    %381 = vmatpush1.msra.mxu0 %v342
    %382 = vmatprep.subr.mxu0 0.0
    %383 = vmatpush1.msra.mxu0 %v343
    %384 = vmatprep.subr.mxu0 0.0
    %385 = vmatpush1.msra.mxu0 %v344
    %386 = vmatprep.subr.mxu0 0.0
    %387 = vmatpush1.msra.mxu0 %v345
    %388 = vmatprep.subr.mxu0 0.0
    %389 = vmatpush1.msra.mxu0 0.0
    %390 = vmatprep.subr.mxu0 0.0
    %391 = vmatpush1.msra.mxu0 0.0
    %392 = vmatprep.subr.mxu0 0.0
    %393 = vmatpush1.msra.mxu0 0.0
    %394 = vmatprep.subr.mxu0 0.0
    %395 = vmatpush1.msra.mxu0 0.0
    %396 = vmatprep.subr.mxu0 0.0
    %397 = vmatpush1.msra.mxu0 0.0
    %398 = vmatprep.subr.mxu0 0.0
    %399 = vmatpush1.msra.mxu0 0.0
    %400 = vmatprep.subr.mxu0 0.0
    %401 = vmatpush1.msra.mxu0 0.0
    %402 = vmatprep.subr.mxu0 0.0
    %403 = vmatpush1.msra.mxu0 0.0
    %404 = vmatprep.subr.mxu0 0.0
    %405 = vmatpush1.msra.mxu0 0.0
    %406 = vmatprep.subr.mxu0 0.0
    %407 = vmatpush1.msra.mxu0 0.0
    %408 = vmatprep.subr.mxu0 0.0
    %409 = vmatpush1.msra.mxu0 0.0
    %410 = vmatprep.subr.mxu0 0.0
    %411 = vmatpush1.msra.mxu0 0.0
    %412 = vmatprep.subr.mxu0 0.0
    %413 = vmatpush1.msra.mxu0 0.0
    %414 = vmatprep.subr.mxu0 0.0
    %415 = vmatpush1.msra.mxu0 0.0
    %416 = vmatprep.subr.mxu0 0.0
    %417 = vmatpush1.msra.mxu0 0.0
    %418 = vmatprep.subr.mxu0 0.0
    %419 = vmatpush1.msra.mxu0 0.0
    %420 = vmatprep.subr.mxu0 0.0
    %421 = vmatpush1.msra.mxu0 0.0
    %422 = vmatprep.subr.mxu0 0.0
    %423 = vmatpush1.msra.mxu0 0.0
    %424 = vmatprep.subr.mxu0 0.0
    %425 = vmatpush1.msra.mxu0 0.0
    %426 = vmatprep.subr.mxu0 0.0
    %427 = vmatpush1.msra.mxu0 0.0
    %428 = vmatprep.mubr.f32.mxu0 0.0
    %429 = vmatmul.mubr.f32.gmra.mrb[0].mxu0 %v353
    %v430 = vpop.f32.mrb[0].mxu0
    %v431 = vadd.f32 %v350, %v430
    %v432 = vpop.f32.mrb[0].mxu0
    %433 = vmatprep.mubr.f32.mxu0 0.0
    %434 = vmatmul.mubr.f32.gmra.mrb[0].mxu0 %v356
    %v435 = vpop.f32.mrb[0].mxu0
    %v436 = vadd.f32 %v350, %v435
    %v437 = vpop.f32.mrb[0].mxu0
    %438 = vmatprep.mubr.f32.mxu0 0.0
    %439 = vmatmul.mubr.f32.gmra.mrb[0].mxu0 %v359
    %v440 = vpop.f32.mrb[0].mxu0
    %v441 = vadd.f32 %v350, %v440
    %v442 = vpop.f32.mrb[0].mxu0
    %443 = vmatprep.mubr.f32.mxu0 0.0
    %444 = vmatmul.mubr.f32.gmra.mrb[0].mxu0 %v362
    %v445 = vpop.f32.mrb[0].mxu0
    %v446 = vadd.f32 %v350, %v445
    %v447 = vpop.f32.mrb[0].mxu0
    %448 = vdwg.mxu0
    %v449 = vmax.f32 %v431, 0.0
    %v450 = vmax.f32 %v436, 0.0
    %v451 = vmax.f32 %v441, 0.0
    %v452 = vmax.f32 %v446, 0.0
    %v453 = vld [vmem:[#allocation9 + $0x2] sm:$0x1]
    %v454 = vlaneseq
    %v455 = vshrl.u32 %v454, 7
    %v456 = vsub.s32 0, %v455
    %v457 = vrot.slane %v453, %v456
    %459 = vrot.lane.b32.xlu0 %v457, 32
    %v460 = vpop.permute.xlu0 %459
    %v462 = vadd.f32 %v211, %v460
    %v463 = vadd.f32 %v216, %v460
    %v464 = vadd.f32 %v221, %v460
    %v465 = vadd.f32 %v226, %v460
    %470 = vrot.lane.b32.xlu0 %v462, 96
    %v471 = vpop.permute.xlu0 %470
    %472 = vrot.lane.b32.xlu0 %v463, 96
    %v473 = vpop.permute.xlu0 %472
    %474 = vrot.lane.b32.xlu0 %v464, 96
    %v475 = vpop.permute.xlu0 %474
    %476 = vrot.lane.b32.xlu0 %v465, 96
    %v477 = vpop.permute.xlu0 %476
    %v482 = vadd.f32 %v449, %v471
    %v483 = vadd.f32 %v450, %v473
    %v484 = vadd.f32 %v451, %v475
    %v485 = vadd.f32 %v452, %v477
    %v486 = vmax.f32 %v482, 0.0
    %v487 = vmax.f32 %v483, 0.0
    %v488 = vmax.f32 %v484, 0.0
    %v489 = vmax.f32 %v485, 0.0
    %v490 = vrot.slane %v486, 6
    %v491 = vrot.slane %v487, 6
    %v492 = vrot.slane %v488, 6
    %v493 = vrot.slane %v489, 6
    %v494 = vsel %vm271, %v492, %v493
    %v495 = vsel %vm271, %v491, %v492
    %v496 = vsel %vm271, %v490, %v491
    %v497 = vsel %vm271, %v493, %v490
    %v498 = vmul.f32 %v497, %v284
    %v499 = vmul.f32 %v496, %v285
    %v500 = vmul.f32 %v495, %v286
    %v501 = vmul.f32 %v494, %v287
    %v502 = vrot.slane %v486, 4
    %v503 = vrot.slane %v487, 4
    %v504 = vrot.slane %v488, 4
    %v505 = vrot.slane %v489, 4
    %vm506 = vcmp.lt.s32.totalorder %v70, 4
    %v507 = vsel %vm506, %v504, %v505
    %v508 = vsel %vm506, %v503, %v504
    %v509 = vsel %vm506, %v502, %v503
    %v510 = vsel %vm506, %v505, %v502
    %vm511 = vcmp.ge.s32.totalorder %v118, 4
    %vm512 = vcmp.ge.s32.totalorder %v119, 4
    %vm513 = vcmp.ge.s32.totalorder %v120, 4
    %vm514 = vcmp.ge.s32.totalorder %v121, 4
    %v515 = vsel %vm511, 1, 0
    %v516 = vsel %vm512, 1, 0
    %v517 = vsel %vm513, 1, 0
    %v518 = vsel %vm514, 1, 0
    %v519 = vcvt.s32.f32 %v515
    %v520 = vcvt.s32.f32 %v516
    %v521 = vcvt.s32.f32 %v517
    %v522 = vcvt.s32.f32 %v518
    %v523 = vmul.f32 %v510, %v519
    %v524 = vmul.f32 %v509, %v520
    %v525 = vmul.f32 %v508, %v521
    %v526 = vmul.f32 %v507, %v522
    %531 = vrot.lane.b32.xlu0 %v498, 32
    %v532 = vpop.permute.xlu0 %531
    %533 = vrot.lane.b32.xlu0 %v499, 32
    %v534 = vpop.permute.xlu0 %533
    %535 = vrot.lane.b32.xlu0 %v500, 32
    %v536 = vpop.permute.xlu0 %535
    %537 = vrot.lane.b32.xlu0 %v501, 32
    %v538 = vpop.permute.xlu0 %537
    %547 = vrot.lane.b32.xlu0 %v523, 64
    %v548 = vpop.permute.xlu0 %547
    %549 = vrot.lane.b32.xlu0 %v524, 64
    %v550 = vpop.permute.xlu0 %549
    %551 = vrot.lane.b32.xlu0 %v525, 64
    %v552 = vpop.permute.xlu0 %551
    %553 = vrot.lane.b32.xlu0 %v526, 64
    %v554 = vpop.permute.xlu0 %553
    %v559 = vsel %vm324, %v486, %v532
    %v560 = vsel %vm324, %v487, %v534
    %v561 = vsel %vm324, %v488, %v536
    %v562 = vsel %vm324, %v489, %v538
    %v563 = vsel %vm329, %v559, %v548
    %v564 = vsel %vm329, %v560, %v550
    %v565 = vsel %vm329, %v561, %v552
    %v566 = vsel %vm329, %v562, %v554
    %v567 = vld [vmem:[#allocation8 + $0x70] sm:$0xff]
    %v568 = vld [vmem:[#allocation8 + $0x78] sm:$0xff]
    %v569 = vld [vmem:[#allocation8 + $0x80] sm:$0xff]
    %v570 = vld [vmem:[#allocation8 + $0x88] sm:$0xff]
    %v571 = vld [vmem:[#allocation8 + $0x90] sm:$0xff]
    %v572 = vld [vmem:[#allocation8 + $0x98] sm:$0xff]
    %v573 = vld [vmem:[#allocation8 + $0xa0] sm:$0xff]
    %v574 = vld [vmem:[#allocation8 + $0xa8] sm:$0xff]
    %v575 = vld [vmem:[#allocation8 + $0xb0] sm:$0xff]
    %v576 = vld [vmem:[#allocation8 + $0xb8] sm:$0xff]
    %v577 = vld [vmem:[#allocation8 + $0xc0] sm:$0xff]
    %v578 = vld [vmem:[#allocation8 + $0xc8] sm:$0xff]
    %v579 = vld [vmem:[#allocation9 + $0x3] sm:$0x1]
    %v580 = vlaneseq
    %v581 = vshrl.u32 %v580, 7
    %v582 = vsub.s32 0, %v581
    %v583 = vrot.slane %v579, %v582
    %v585 = vsel %vm351, %v563, 0
    %v588 = vsel %vm351, %v564, 0
    %v591 = vsel %vm351, %v565, 0
    %v594 = vsel %vm351, %v566, 0
    %596 = vmatprep.subr.mxu0 0.0
    %597 = vmatpush1.msra.mxu0 %v567
    %598 = vmatprep.subr.mxu0 0.0
    %599 = vmatpush1.msra.mxu0 %v568
    %600 = vmatprep.subr.mxu0 0.0
    %601 = vmatpush1.msra.mxu0 %v569
    %602 = vmatprep.subr.mxu0 0.0
    %603 = vmatpush1.msra.mxu0 %v570
    %604 = vmatprep.subr.mxu0 0.0
    %605 = vmatpush1.msra.mxu0 %v571
    %606 = vmatprep.subr.mxu0 0.0
    %607 = vmatpush1.msra.mxu0 %v572
    %608 = vmatprep.subr.mxu0 0.0
    %609 = vmatpush1.msra.mxu0 %v573
    %610 = vmatprep.subr.mxu0 0.0
    %611 = vmatpush1.msra.mxu0 %v574
    %612 = vmatprep.subr.mxu0 0.0
    %613 = vmatpush1.msra.mxu0 %v575
    %614 = vmatprep.subr.mxu0 0.0
    %615 = vmatpush1.msra.mxu0 %v576
    %616 = vmatprep.subr.mxu0 0.0
    %617 = vmatpush1.msra.mxu0 %v577
    %618 = vmatprep.subr.mxu0 0.0
    %619 = vmatpush1.msra.mxu0 %v578
    %620 = vmatprep.subr.mxu0 0.0
    %621 = vmatpush1.msra.mxu0 0.0
    %622 = vmatprep.subr.mxu0 0.0
    %623 = vmatpush1.msra.mxu0 0.0
    %624 = vmatprep.subr.mxu0 0.0
    %625 = vmatpush1.msra.mxu0 0.0
    %626 = vmatprep.subr.mxu0 0.0
    %627 = vmatpush1.msra.mxu0 0.0
    %628 = vmatprep.subr.mxu0 0.0
    %629 = vmatpush1.msra.mxu0 0.0
    %630 = vmatprep.subr.mxu0 0.0
    %631 = vmatpush1.msra.mxu0 0.0
    %632 = vmatprep.subr.mxu0 0.0
    %633 = vmatpush1.msra.mxu0 0.0
    %634 = vmatprep.subr.mxu0 0.0
    %635 = vmatpush1.msra.mxu0 0.0
    %636 = vmatprep.subr.mxu0 0.0
    %637 = vmatpush1.msra.mxu0 0.0
    %638 = vmatprep.subr.mxu0 0.0
    %639 = vmatpush1.msra.mxu0 0.0
    %640 = vmatprep.subr.mxu0 0.0
    %641 = vmatpush1.msra.mxu0 0.0
    %642 = vmatprep.subr.mxu0 0.0
    %643 = vmatpush1.msra.mxu0 0.0
    %644 = vmatprep.subr.mxu0 0.0
    %645 = vmatpush1.msra.mxu0 0.0
    %646 = vmatprep.subr.mxu0 0.0
    %647 = vmatpush1.msra.mxu0 0.0
    %648 = vmatprep.subr.mxu0 0.0
    %649 = vmatpush1.msra.mxu0 0.0
    %650 = vmatprep.subr.mxu0 0.0
    %651 = vmatpush1.msra.mxu0 0.0
    %652 = vmatprep.subr.mxu0 0.0
    %653 = vmatpush1.msra.mxu0 0.0
    %654 = vmatprep.subr.mxu0 0.0
    %655 = vmatpush1.msra.mxu0 0.0
    %656 = vmatprep.subr.mxu0 0.0
    %657 = vmatpush1.msra.mxu0 0.0
    %658 = vmatprep.subr.mxu0 0.0
    %659 = vmatpush1.msra.mxu0 0.0
    %660 = vmatprep.mubr.f32.mxu0 0.0
    %661 = vmatmul.mubr.f32.gmra.mrb[0].mxu0 %v585
    %v662 = vpop.f32.mrb[0].mxu0
    %v663 = vadd.f32 %v583, %v662
    %v664 = vpop.f32.mrb[0].mxu0
    %665 = vmatprep.mubr.f32.mxu0 0.0
    %666 = vmatmul.mubr.f32.gmra.mrb[0].mxu0 %v588
    %v667 = vpop.f32.mrb[0].mxu0
    %v668 = vadd.f32 %v583, %v667
    %v669 = vpop.f32.mrb[0].mxu0
    %670 = vmatprep.mubr.f32.mxu0 0.0
    %671 = vmatmul.mubr.f32.gmra.mrb[0].mxu0 %v591
    %v672 = vpop.f32.mrb[0].mxu0
    %v673 = vadd.f32 %v583, %v672
    %v674 = vpop.f32.mrb[0].mxu0
    %675 = vmatprep.mubr.f32.mxu0 0.0
    %676 = vmatmul.mubr.f32.gmra.mrb[0].mxu0 %v594
    %v677 = vpop.f32.mrb[0].mxu0
    %v678 = vadd.f32 %v583, %v677
    %v679 = vpop.f32.mrb[0].mxu0
    %680 = vdwg.mxu0
    %v681 = vmax.f32 %v663, 0.0
    %v682 = vmax.f32 %v668, 0.0
    %v683 = vmax.f32 %v673, 0.0
    %v684 = vmax.f32 %v678, 0.0
    %v685 = vrot.slane %v681, 6
    %v686 = vrot.slane %v682, 6
    %v687 = vrot.slane %v683, 6
    %v688 = vrot.slane %v684, 6
    %v689 = vsel %vm271, %v687, %v688
    %v690 = vsel %vm271, %v686, %v687
    %v691 = vsel %vm271, %v685, %v686
    %v692 = vsel %vm271, %v688, %v685
    %v693 = vmul.f32 %v692, %v284
    %v694 = vmul.f32 %v691, %v285
    %v695 = vmul.f32 %v690, %v286
    %v696 = vmul.f32 %v689, %v287
    %v697 = vrot.slane %v681, 4
    %v698 = vrot.slane %v682, 4
    %v699 = vrot.slane %v683, 4
    %v700 = vrot.slane %v684, 4
    %v701 = vsel %vm506, %v699, %v700
    %v702 = vsel %vm506, %v698, %v699
    %v703 = vsel %vm506, %v697, %v698
    %v704 = vsel %vm506, %v700, %v697
    %v705 = vmul.f32 %v704, %v519
    %v706 = vmul.f32 %v703, %v520
    %v707 = vmul.f32 %v702, %v521
    %v708 = vmul.f32 %v701, %v522
    %713 = vrot.lane.b32.xlu0 %v693, 32
    %v714 = vpop.permute.xlu0 %713
    %715 = vrot.lane.b32.xlu0 %v694, 32
    %v716 = vpop.permute.xlu0 %715
    %717 = vrot.lane.b32.xlu0 %v695, 32
    %v718 = vpop.permute.xlu0 %717
    %719 = vrot.lane.b32.xlu0 %v696, 32
    %v720 = vpop.permute.xlu0 %719
    %729 = vrot.lane.b32.xlu0 %v705, 64
    %v730 = vpop.permute.xlu0 %729
    %731 = vrot.lane.b32.xlu0 %v706, 64
    %v732 = vpop.permute.xlu0 %731
    %733 = vrot.lane.b32.xlu0 %v707, 64
    %v734 = vpop.permute.xlu0 %733
    %735 = vrot.lane.b32.xlu0 %v708, 64
    %v736 = vpop.permute.xlu0 %735
    %v741 = vsel %vm324, %v681, %v714
    %v742 = vsel %vm324, %v682, %v716
    %v743 = vsel %vm324, %v683, %v718
    %v744 = vsel %vm324, %v684, %v720
    %v745 = vsel %vm329, %v741, %v730
    %v746 = vsel %vm329, %v742, %v732
    %v747 = vsel %vm329, %v743, %v734
    %v748 = vsel %vm329, %v744, %v736
    %v749 = vld [vmem:[#allocation8 + $0xd0] sm:$0xff]
    %v750 = vld [vmem:[#allocation8 + $0xd8] sm:$0xff]
    %v751 = vld [vmem:[#allocation8 + $0xe0] sm:$0xff]
    %v752 = vld [vmem:[#allocation8 + $0xe8] sm:$0xff]
    %v753 = vld [vmem:[#allocation8 + $0xf0] sm:$0xff]
    %v754 = vld [vmem:[#allocation8 + $0xf8] sm:$0xff]
    %v755 = vld [vmem:[#allocation8 + $0x100] sm:$0xff]
    %v756 = vld [vmem:[#allocation8 + $0x108] sm:$0xff]
    %v757 = vld [vmem:[#allocation8 + $0x110] sm:$0xff]
    %v758 = vld [vmem:[#allocation8 + $0x118] sm:$0xff]
    %v759 = vld [vmem:[#allocation8 + $0x120] sm:$0xff]
    %v760 = vld [vmem:[#allocation8 + $0x128] sm:$0xff]
    %v761 = vld [vmem:[#allocation9 + $0x4] sm:$0x1]
    %v762 = vlaneseq
    %v763 = vshrl.u32 %v762, 7
    %v764 = vsub.s32 0, %v763
    %v765 = vrot.slane %v761, %v764
    %v767 = vsel %vm351, %v745, 0
    %v770 = vsel %vm351, %v746, 0
    %v773 = vsel %vm351, %v747, 0
    %v776 = vsel %vm351, %v748, 0
    %778 = vmatprep.subr.mxu0 0.0
    %779 = vmatpush1.msra.mxu0 %v749
    %780 = vmatprep.subr.mxu0 0.0
    %781 = vmatpush1.msra.mxu0 %v750
    %782 = vmatprep.subr.mxu0 0.0
    %783 = vmatpush1.msra.mxu0 %v751
    %784 = vmatprep.subr.mxu0 0.0
    %785 = vmatpush1.msra.mxu0 %v752
    %786 = vmatprep.subr.mxu0 0.0
    %787 = vmatpush1.msra.mxu0 %v753
    %788 = vmatprep.subr.mxu0 0.0
    %789 = vmatpush1.msra.mxu0 %v754
    %790 = vmatprep.subr.mxu0 0.0
    %791 = vmatpush1.msra.mxu0 %v755
    %792 = vmatprep.subr.mxu0 0.0
    %793 = vmatpush1.msra.mxu0 %v756
    %794 = vmatprep.subr.mxu0 0.0
    %795 = vmatpush1.msra.mxu0 %v757
    %796 = vmatprep.subr.mxu0 0.0
    %797 = vmatpush1.msra.mxu0 %v758
    %798 = vmatprep.subr.mxu0 0.0
    %799 = vmatpush1.msra.mxu0 %v759
    %800 = vmatprep.subr.mxu0 0.0
    %801 = vmatpush1.msra.mxu0 %v760
    %802 = vmatprep.subr.mxu0 0.0
    %803 = vmatpush1.msra.mxu0 0.0
    %804 = vmatprep.subr.mxu0 0.0
    %805 = vmatpush1.msra.mxu0 0.0
    %806 = vmatprep.subr.mxu0 0.0
    %807 = vmatpush1.msra.mxu0 0.0
    %808 = vmatprep.subr.mxu0 0.0
    %809 = vmatpush1.msra.mxu0 0.0
    %810 = vmatprep.subr.mxu0 0.0
    %811 = vmatpush1.msra.mxu0 0.0
    %812 = vmatprep.subr.mxu0 0.0
    %813 = vmatpush1.msra.mxu0 0.0
    %814 = vmatprep.subr.mxu0 0.0
    %815 = vmatpush1.msra.mxu0 0.0
    %816 = vmatprep.subr.mxu0 0.0
    %817 = vmatpush1.msra.mxu0 0.0
    %818 = vmatprep.subr.mxu0 0.0
    %819 = vmatpush1.msra.mxu0 0.0
    %820 = vmatprep.subr.mxu0 0.0
    %821 = vmatpush1.msra.mxu0 0.0
    %822 = vmatprep.subr.mxu0 0.0
    %823 = vmatpush1.msra.mxu0 0.0
    %824 = vmatprep.subr.mxu0 0.0
    %825 = vmatpush1.msra.mxu0 0.0
    %826 = vmatprep.subr.mxu0 0.0
    %827 = vmatpush1.msra.mxu0 0.0
    %828 = vmatprep.subr.mxu0 0.0
    %829 = vmatpush1.msra.mxu0 0.0
    %830 = vmatprep.subr.mxu0 0.0
    %831 = vmatpush1.msra.mxu0 0.0
    %832 = vmatprep.subr.mxu0 0.0
    %833 = vmatpush1.msra.mxu0 0.0
    %834 = vmatprep.subr.mxu0 0.0
    %835 = vmatpush1.msra.mxu0 0.0
    %836 = vmatprep.subr.mxu0 0.0
    %837 = vmatpush1.msra.mxu0 0.0
    %838 = vmatprep.subr.mxu0 0.0
    %839 = vmatpush1.msra.mxu0 0.0
    %840 = vmatprep.subr.mxu0 0.0
    %841 = vmatpush1.msra.mxu0 0.0
    %842 = vmatprep.mubr.f32.mxu0 0.0
    %843 = vmatmul.mubr.f32.gmra.mrb[0].mxu0 %v767
    %v844 = vpop.f32.mrb[0].mxu0
    %v845 = vadd.f32 %v765, %v844
    %v846 = vpop.f32.mrb[0].mxu0
    %847 = vmatprep.mubr.f32.mxu0 0.0
    %848 = vmatmul.mubr.f32.gmra.mrb[0].mxu0 %v770
    %v849 = vpop.f32.mrb[0].mxu0
    %v850 = vadd.f32 %v765, %v849
    %v851 = vpop.f32.mrb[0].mxu0
    %852 = vmatprep.mubr.f32.mxu0 0.0
    %853 = vmatmul.mubr.f32.gmra.mrb[0].mxu0 %v773
    %v854 = vpop.f32.mrb[0].mxu0
    %v855 = vadd.f32 %v765, %v854
    %v856 = vpop.f32.mrb[0].mxu0
    %857 = vmatprep.mubr.f32.mxu0 0.0
    %858 = vmatmul.mubr.f32.gmra.mrb[0].mxu0 %v776
    %v859 = vpop.f32.mrb[0].mxu0
    %v860 = vadd.f32 %v765, %v859
    %v861 = vpop.f32.mrb[0].mxu0
    %862 = vdwg.mxu0
    %v863 = vmax.f32 %v845, 0.0
    %v864 = vmax.f32 %v850, 0.0
    %v865 = vmax.f32 %v855, 0.0
    %v866 = vmax.f32 %v860, 0.0
    %v867 = vadd.f32 %v863, %v486
    %v868 = vadd.f32 %v864, %v487
    %v869 = vadd.f32 %v865, %v488
    %v870 = vadd.f32 %v866, %v489
    %v871 = vmax.f32 %v867, 0.0
    %v872 = vmax.f32 %v868, 0.0
    %v873 = vmax.f32 %v869, 0.0
    %v874 = vmax.f32 %v870, 0.0
    %875 = vst.msk [vmem:[#allocation2] sm:$0xff] %vm324, %v871
    %876 = vst.msk [vmem:[#allocation2 + $0x8] sm:$0xff] %vm324, %v872
    %877 = vst.msk [vmem:[#allocation2 + $0x10] sm:$0xff] %vm324, %v873
    %878 = vst.msk [vmem:[#allocation2 + $0x18] sm:$0xff] %vm324, %v874
    %v879 = vld [vmem:[#allocation2 + $0xf] sm:$0x1]
    %v880 = vld [vmem:[#allocation2 + $0x1f] sm:$0x1]
    %v882 = vrot.slane %v880, 7
    %vm884 = vcmask 1040384
    %v885 = vsel %vm884, %v879, %v882
    %v886 = vld [vmem:[#allocation8 + $0x130] sm:$0xff]
    %v887 = vld [vmem:[#allocation8 + $0x138] sm:$0xff]
    %v888 = vld [vmem:[#allocation8 + $0x140] sm:$0xff]
    %v889 = vld [vmem:[#allocation8 + $0x148] sm:$0xff]
    %v890 = vld [vmem:[#allocation6] sm:$0x3]
    %v891 = vld [vmem:[#allocation8 + $0x150] sm:$0xf]
    %vm892 = vcmask 31744
    %v894 = vsel %vm892, %v890, 0
    %vm896 = vcmask 1043456
    %v898 = vsel %vm896, %v891, 0
    %900 = vmatprep.subr.mxu0 0.0
    %901 = vmatpush1.msra.mxu0 %v898
    %902 = vmatprep.subr.mxu0 0.0
    %903 = vmatpush1.msra.mxu0 0.0
    %904 = vmatprep.subr.mxu0 0.0
    %905 = vmatpush1.msra.mxu0 0.0
    %906 = vmatprep.subr.mxu0 0.0
    %907 = vmatpush1.msra.mxu0 0.0
    %908 = vmatprep.subr.mxu0 0.0
    %909 = vmatpush1.msra.mxu0 0.0
    %910 = vmatprep.subr.mxu0 0.0
    %911 = vmatpush1.msra.mxu0 0.0
    %912 = vmatprep.subr.mxu0 0.0
    %913 = vmatpush1.msra.mxu0 0.0
    %914 = vmatprep.subr.mxu0 0.0
    %915 = vmatpush1.msra.mxu0 0.0
    %916 = vmatprep.subr.mxu0 0.0
    %917 = vmatpush1.msra.mxu0 0.0
    %918 = vmatprep.subr.mxu0 0.0
    %919 = vmatpush1.msra.mxu0 0.0
    %920 = vmatprep.subr.mxu0 0.0
    %921 = vmatpush1.msra.mxu0 0.0
    %922 = vmatprep.subr.mxu0 0.0
    %923 = vmatpush1.msra.mxu0 0.0
    %924 = vmatprep.subr.mxu0 0.0
    %925 = vmatpush1.msra.mxu0 0.0
    %926 = vmatprep.subr.mxu0 0.0
    %927 = vmatpush1.msra.mxu0 0.0
    %928 = vmatprep.subr.mxu0 0.0
    %929 = vmatpush1.msra.mxu0 0.0
    %930 = vmatprep.subr.mxu0 0.0
    %931 = vmatpush1.msra.mxu0 0.0
    %932 = vmatprep.subr.mxu0 0.0
    %933 = vmatpush1.msra.mxu0 0.0
    %934 = vmatprep.subr.mxu0 0.0
    %935 = vmatpush1.msra.mxu0 0.0
    %936 = vmatprep.subr.mxu0 0.0
    %937 = vmatpush1.msra.mxu0 0.0
    %938 = vmatprep.subr.mxu0 0.0
    %939 = vmatpush1.msra.mxu0 0.0
    %940 = vmatprep.subr.mxu0 0.0
    %941 = vmatpush1.msra.mxu0 0.0
    %942 = vmatprep.subr.mxu0 0.0
    %943 = vmatpush1.msra.mxu0 0.0
    %944 = vmatprep.subr.mxu0 0.0
    %945 = vmatpush1.msra.mxu0 0.0
    %946 = vmatprep.subr.mxu0 0.0
    %947 = vmatpush1.msra.mxu0 0.0
    %948 = vmatprep.subr.mxu0 0.0
    %949 = vmatpush1.msra.mxu0 0.0
    %950 = vmatprep.subr.mxu0 0.0
    %951 = vmatpush1.msra.mxu0 0.0
    %952 = vmatprep.subr.mxu0 0.0
    %953 = vmatpush1.msra.mxu0 0.0
    %954 = vmatprep.subr.mxu0 0.0
    %955 = vmatpush1.msra.mxu0 0.0
    %956 = vmatprep.subr.mxu0 0.0
    %957 = vmatpush1.msra.mxu0 0.0
    %958 = vmatprep.subr.mxu0 0.0
    %959 = vmatpush1.msra.mxu0 0.0
    %960 = vmatprep.subr.mxu0 0.0
    %961 = vmatpush1.msra.mxu0 0.0
    %962 = vmatprep.subr.mxu0 0.0
    %963 = vmatpush1.msra.mxu0 0.0
    %964 = vmatprep.mubr.f32.mxu0 0.0
    %965 = vmatmul.mubr.f32.gmra.mrb[0].mxu0 %v894
    %v966 = vpop.f32.mrb[0].mxu0
    %v967 = vadd.f32 0.0, %v966
    %v968 = vpop.f32.mrb[0].mxu0
    %969 = vdwg.mxu0
    %v971 = vsel %vm324, %v885, 0
    %973 = vmatprep.subr.mxu0 0.0
    %974 = vmatpush1.msra.mxu0 %v886
    %975 = vmatprep.subr.mxu0 0.0
    %976 = vmatpush1.msra.mxu0 %v887
    %977 = vmatprep.subr.mxu0 0.0
    %978 = vmatpush1.msra.mxu0 %v888
    %979 = vmatprep.subr.mxu0 0.0
    %980 = vmatpush1.msra.mxu0 %v889
    %981 = vmatprep.subr.mxu0 0.0
    %982 = vmatpush1.msra.mxu0 0.0
    %983 = vmatprep.subr.mxu0 0.0
    %984 = vmatpush1.msra.mxu0 0.0
    %985 = vmatprep.subr.mxu0 0.0
    %986 = vmatpush1.msra.mxu0 0.0
    %987 = vmatprep.subr.mxu0 0.0
    %988 = vmatpush1.msra.mxu0 0.0
    %989 = vmatprep.subr.mxu0 0.0
    %990 = vmatpush1.msra.mxu0 0.0
    %991 = vmatprep.subr.mxu0 0.0
    %992 = vmatpush1.msra.mxu0 0.0
    %993 = vmatprep.subr.mxu0 0.0
    %994 = vmatpush1.msra.mxu0 0.0
    %995 = vmatprep.subr.mxu0 0.0
    %996 = vmatpush1.msra.mxu0 0.0
    %997 = vmatprep.subr.mxu0 0.0
    %998 = vmatpush1.msra.mxu0 0.0
    %999 = vmatprep.subr.mxu0 0.0
    %1000 = vmatpush1.msra.mxu0 0.0
    %1001 = vmatprep.subr.mxu0 0.0
    %1002 = vmatpush1.msra.mxu0 0.0
    %1003 = vmatprep.subr.mxu0 0.0
    %1004 = vmatpush1.msra.mxu0 0.0
    %1005 = vmatprep.subr.mxu0 0.0
    %1006 = vmatpush1.msra.mxu0 0.0
    %1007 = vmatprep.subr.mxu0 0.0
    %1008 = vmatpush1.msra.mxu0 0.0
    %1009 = vmatprep.subr.mxu0 0.0
    %1010 = vmatpush1.msra.mxu0 0.0
    %1011 = vmatprep.subr.mxu0 0.0
    %1012 = vmatpush1.msra.mxu0 0.0
    %1013 = vmatprep.subr.mxu0 0.0
    %1014 = vmatpush1.msra.mxu0 0.0
    %1015 = vmatprep.subr.mxu0 0.0
    %1016 = vmatpush1.msra.mxu0 0.0
    %1017 = vmatprep.subr.mxu0 0.0
    %1018 = vmatpush1.msra.mxu0 0.0
    %1019 = vmatprep.subr.mxu0 0.0
    %1020 = vmatpush1.msra.mxu0 0.0
    %1021 = vmatprep.subr.mxu0 0.0
    %1022 = vmatpush1.msra.mxu0 0.0
    %1023 = vmatprep.subr.mxu0 0.0
    %1024 = vmatpush1.msra.mxu0 0.0
    %1025 = vmatprep.subr.mxu0 0.0
    %1026 = vmatpush1.msra.mxu0 0.0
    %1027 = vmatprep.subr.mxu0 0.0
    %1028 = vmatpush1.msra.mxu0 0.0
    %1029 = vmatprep.subr.mxu0 0.0
    %1030 = vmatpush1.msra.mxu0 0.0
    %1031 = vmatprep.subr.mxu0 0.0
    %1032 = vmatpush1.msra.mxu0 0.0
    %1033 = vmatprep.subr.mxu0 0.0
    %1034 = vmatpush1.msra.mxu0 0.0
    %1035 = vmatprep.subr.mxu0 0.0
    %1036 = vmatpush1.msra.mxu0 0.0
    %1037 = vmatprep.mubr.f32.mxu0 0.0
    %1038 = vmatmul.mubr.f32.gmra.mrb[0].mxu0 %v971
    %v1039 = vpop.f32.mrb[0].mxu0
    %v1040 = vadd.f32 %v967, %v1039
    %v1041 = vpop.f32.mrb[0].mxu0
    %1042 = vdwg.mxu0
    %v1043 = vld [vmem:[#allocation9 + $0x5] sm:$0x1]
    %v1044 = vlaneseq
    %v1045 = vshrl.u32 %v1044, 7
    %v1046 = vsub.s32 0, %v1045
    %v1047 = vrot.slane %v1043, %v1046
    %v1048 = vadd.f32 %v1040, %v1047
    %v1049 = vmax.f32 %v1048, 0.0
    %v1050 = vld [vmem:[#allocation8 + $0x160] sm:$0xff]
    %v1051 = vld [vmem:[#allocation8 + $0x168] sm:$0xff]
    %v1052 = vld [vmem:[#allocation8 + $0x170] sm:$0xff]
    %v1053 = vld [vmem:[#allocation8 + $0x178] sm:$0xff]
    %v1054 = vld [vmem:[#allocation8 + $0x180] sm:$0xf]
    %v1055 = vld [vmem:[#allocation9 + $0x6] sm:$0x1]
    %v1056 = vlaneseq
    %v1057 = vshrl.u32 %v1056, 7
    %v1058 = vsub.s32 0, %v1057
    %v1059 = vrot.slane %v1055, %v1058
    %vm1060 = vcmask 293888
    %v1062 = vsel %vm1060, %v1049, 0
    %v1065 = vsel %vm896, %v1054, 0
    %1067 = vmatprep.subr.mxu0 0.0
    %1068 = vmatpush1.msra.mxu0 %v1050
    %1069 = vmatprep.subr.mxu0 0.0
    %1070 = vmatpush1.msra.mxu0 %v1051
    %1071 = vmatprep.subr.mxu0 0.0
    %1072 = vmatpush1.msra.mxu0 %v1052
    %1073 = vmatprep.subr.mxu0 0.0
    %1074 = vmatpush1.msra.mxu0 %v1053
    %1075 = vmatprep.subr.mxu0 0.0
    %1076 = vmatpush1.msra.mxu0 %v1065
    %1077 = vmatprep.subr.mxu0 0.0
    %1078 = vmatpush1.msra.mxu0 0.0
    %1079 = vmatprep.subr.mxu0 0.0
    %1080 = vmatpush1.msra.mxu0 0.0
    %1081 = vmatprep.subr.mxu0 0.0
    %1082 = vmatpush1.msra.mxu0 0.0
    %1083 = vmatprep.subr.mxu0 0.0
    %1084 = vmatpush1.msra.mxu0 0.0
    %1085 = vmatprep.subr.mxu0 0.0
    %1086 = vmatpush1.msra.mxu0 0.0
    %1087 = vmatprep.subr.mxu0 0.0
    %1088 = vmatpush1.msra.mxu0 0.0
    %1089 = vmatprep.subr.mxu0 0.0
    %1090 = vmatpush1.msra.mxu0 0.0
    %1091 = vmatprep.subr.mxu0 0.0
    %1092 = vmatpush1.msra.mxu0 0.0
    %1093 = vmatprep.subr.mxu0 0.0
    %1094 = vmatpush1.msra.mxu0 0.0
    %1095 = vmatprep.subr.mxu0 0.0
    %1096 = vmatpush1.msra.mxu0 0.0
    %1097 = vmatprep.subr.mxu0 0.0
    %1098 = vmatpush1.msra.mxu0 0.0
    %1099 = vmatprep.subr.mxu0 0.0
    %1100 = vmatpush1.msra.mxu0 0.0
    %1101 = vmatprep.subr.mxu0 0.0
    %1102 = vmatpush1.msra.mxu0 0.0
    %1103 = vmatprep.subr.mxu0 0.0
    %1104 = vmatpush1.msra.mxu0 0.0
    %1105 = vmatprep.subr.mxu0 0.0
    %1106 = vmatpush1.msra.mxu0 0.0
    %1107 = vmatprep.subr.mxu0 0.0
    %1108 = vmatpush1.msra.mxu0 0.0
    %1109 = vmatprep.subr.mxu0 0.0
    %1110 = vmatpush1.msra.mxu0 0.0
    %1111 = vmatprep.subr.mxu0 0.0
    %1112 = vmatpush1.msra.mxu0 0.0
    %1113 = vmatprep.subr.mxu0 0.0
    %1114 = vmatpush1.msra.mxu0 0.0
    %1115 = vmatprep.subr.mxu0 0.0
    %1116 = vmatpush1.msra.mxu0 0.0
    %1117 = vmatprep.subr.mxu0 0.0
    %1118 = vmatpush1.msra.mxu0 0.0
    %1119 = vmatprep.subr.mxu0 0.0
    %1120 = vmatpush1.msra.mxu0 0.0
    %1121 = vmatprep.subr.mxu0 0.0
    %1122 = vmatpush1.msra.mxu0 0.0
    %1123 = vmatprep.subr.mxu0 0.0
    %1124 = vmatpush1.msra.mxu0 0.0
    %1125 = vmatprep.subr.mxu0 0.0
    %1126 = vmatpush1.msra.mxu0 0.0
    %1127 = vmatprep.subr.mxu0 0.0
    %1128 = vmatpush1.msra.mxu0 0.0
    %1129 = vmatprep.subr.mxu0 0.0
    %1130 = vmatpush1.msra.mxu0 0.0
    %1131 = vmatprep.mubr.f32.mxu0 0.0
    %1132 = vmatmul.mubr.f32.gmra.mrb[0].mxu0 %v1062
    %v1133 = vpop.f32.mrb[0].mxu0
    %v1134 = vadd.f32 %v1059, %v1133
    %v1135 = vpop.f32.mrb[0].mxu0
    %1136 = vdwg.mxu0
    %vm1137 = vcmask 1024
    %1138 = vst.msk [vmem:[#allocation11] sm:$0x3] %vm1137, %v1134
    // Predicated region
    $region34: #{tpu_custom_call.1} parent=1 // pred_check
      _
    $region35: #{tpu_custom_call.1} parent=1 // pred_check_branch
      %1140 = sbr.rel (0) target = $region37
    $region36: #{tpu_custom_call.1} parent=1 // pred_region
      %s1142 = ssub.s32 32, 32
      %1143 = vsyncadd [#allocation5], %s1142
      %s1145 = sshll.u32 [#allocation11], 4
      %s1146 = int_to_ptr.vmem [resolvable:$true] %s1145
      %1148 = dma.vmem_to_hbm [thread:$0]  %s1146, 32, %s4, [#allocation5]
    $region37: #{tpu_custom_call.1} parent=1 // pred_fallthru
      _
    // Predicated region
    $region38: #{tpu_custom_call.1} parent=1 // pred_check
      _
    $region39: #{tpu_custom_call.1} parent=1 // pred_check_branch
      %1150 = sbr.rel (0) target = $region41
    $region40: #{tpu_custom_call.1} parent=1 // pred_region
      %1151 = dma.done [#allocation5], 32
    $region41: #{tpu_custom_call.1} parent=1 // pred_fallthru
      _
    %1152 = vsyncpa [#allocation4], 1
    %1153 = vsyncpa [#allocation7], 1
    %1154 = vsyncpa [#allocation10], 1
    %1155 = vsyncpa [#allocation5], 1

</llo_original>
